<compile_context>
chip_gen: v7x
topology: tpu7x:2x2x1
jax: 0.10.0
libtpu: 0.0.40
codegen_flags: <defaults>
</compile_context>

<pallas_src>
import math
import functools

import jax
import jax.numpy as jnp
from jax import lax
from jax.experimental import pallas as pl
from jax.experimental.pallas import tpu as pltpu


# ------------------------------- Pallas kernel -------------------------------

def _fused_mha_kernel(x_ref, wqkv_ref, bqkv_ref, wo_ref, bo_ref, o_ref, *,
                      n_heads, d_head, scale, approx_recip):
    """One grid step = one batch element; computes the full MHA forward for it."""
    cdt = wqkv_ref.dtype                       # MXU operand dtype (bf16 or f32)
    x = x_ref[0].astype(cdt)                   # (S, D)
    S = x.shape[0]
    D = n_heads * d_head

    # Fused QKV projection: single (S, D) @ (D, 3D) matmul, f32 accumulation.
    qkv = lax.dot_general(x, wqkv_ref[...], (((1,), (0,)), ((), ())),
                          preferred_element_type=jnp.float32)
    qkv = qkv + bqkv_ref[...]                  # (S, 3D) float32

    # Causal mask, shared across heads.
    row = lax.broadcasted_iota(jnp.int32, (S, S), 0)
    col = lax.broadcasted_iota(jnp.int32, (S, S), 1)
    keep = col <= row

    ctx_heads = []
    for h in range(n_heads):                   # static loop -> straight-line MXU calls
        lo = h * d_head
        # scale folded into q: touches S*dh elements instead of S*S scores.
        q = (qkv[:, lo:lo + d_head] * scale).astype(cdt)
        k = qkv[:, D + lo:D + lo + d_head].astype(cdt)
        v = qkv[:, 2 * D + lo:2 * D + lo + d_head].astype(cdt)

        # scores: contract last dims of q and k directly (no explicit transpose).
        s = lax.dot_general(q, k, (((1,), (1,)), ((), ())),
                            preferred_element_type=jnp.float32)    # (S, S)
        s = jnp.where(keep, s, -jnp.inf)

        # numerically stable softmax, all math in f32.
        m = jnp.max(s, axis=-1, keepdims=True)
        p = jnp.exp(s - m)
        l = jnp.sum(p, axis=-1, keepdims=True)
        p = p * pl.reciprocal(l, approx=approx_recip)

        ctx_heads.append(
            lax.dot_general(p.astype(cdt), v, (((1,), (0,)), ((), ())),
                            preferred_element_type=jnp.float32))   # (S, d_head)

    # Re-pack heads on the lane axis and do one output-projection matmul.
    ctx = jnp.concatenate(ctx_heads, axis=-1).astype(cdt)          # (S, D)
    out = lax.dot_general(ctx, wo_ref[...], (((1,), (0,)), ((), ())),
                          preferred_element_type=jnp.float32)
    o_ref[0] = out + bo_ref[...]


# --------------------------------- wrappers -----------------------------------

def _fused_mha_call(xb, wqkv, bqkv, wo, bo, *, n_heads, approx_recip):
    """xb: (B, S, D) f32; weights in compute dtype; biases f32 -> (B, S, D) f32."""
    B, S, D = xb.shape
    d_head = D // n_heads
    scale = 1.0 / math.sqrt(d_head)
    kernel = functools.partial(_fused_mha_kernel, n_heads=n_heads, d_head=d_head,
                               scale=scale, approx_recip=approx_recip)
    return pl.pallas_call(
        kernel,
        out_shape=jax.ShapeDtypeStruct((B, S, D), jnp.float32),
        grid=(B,),
        in_specs=[
            pl.BlockSpec((1, S, D), lambda b: (b, 0, 0)),       # x, one batch per step
            pl.BlockSpec((D, 3 * D), lambda b: (0, 0)),         # fused QKV weight (resident)
            pl.BlockSpec((1, 3 * D), lambda b: (0, 0)),         # fused QKV bias (resident)
            pl.BlockSpec((D, D), lambda b: (0, 0)),             # output-proj weight (resident)
            pl.BlockSpec((1, D), lambda b: (0, 0)),             # output-proj bias (resident)
        ],
        out_specs=pl.BlockSpec((1, S, D), lambda b: (b, 0, 0)),
        compiler_params=pltpu.CompilerParams(
            dimension_semantics=("parallel",),
        ),
    )(xb, wqkv, bqkv, wo, bo)


def multi_head_attention(x, params, n_heads, compute_dtype=jnp.bfloat16):
    """x: (S, B, D) float32 -> (S, B, D) float32 (matches the PyTorch forward).

    compute_dtype: dtype of the MXU matmul operands (accumulation is always f32).
    """
    S, B, D = x.shape
    # Fuse Q/K/V weights into one (D, 3D) matrix; cast weights to compute dtype
    # once (halves weight HBM traffic on the bf16 path). Biases stay f32.
    wqkv = jnp.concatenate([params["wq"], params["wk"], params["wv"]],
                           axis=1).astype(compute_dtype)
    bqkv = jnp.concatenate([params["bq"], params["bk"], params["bv"]]
                           ).astype(jnp.float32).reshape(1, 3 * D)
    wo = params["wo"].astype(compute_dtype)
    bo = params["bo"].astype(jnp.float32).reshape(1, D)

    # Single layout change at the boundary (batch-major for the kernel); all
    # per-head reshapes/transposes happen inside the kernel as lane slices.
    xb = jnp.transpose(x, (1, 0, 2))                       # (B, S, D)
    approx = compute_dtype == jnp.bfloat16
    out_b = _fused_mha_call(xb, wqkv, bqkv, wo, bo,
                            n_heads=n_heads, approx_recip=approx)
    return jnp.transpose(out_b, (1, 0, 2))                 # (S, B, D)


# -------------------------- reference (pure JAX) ------------------------------

def multi_head_attention_ref(x, params, n_heads):
    S, B, D = x.shape
    dh = D // n_heads
    q = x @ params["wq"] + params["bq"]
    k = x @ params["wk"] + params["bk"]
    v = x @ params["wv"] + params["bv"]

    def to_bhsd(t):
        return t.reshape(S, B, n_heads, dh).transpose(1, 2, 0, 3)

    qb, kb, vb = to_bhsd(q), to_bhsd(k), to_bhsd(v)
    s = jnp.einsum("bhqd,bhkd->bhqk", qb, kb) / math.sqrt(dh)
    mask = jnp.triu(jnp.ones((S, S), dtype=bool), k=1)
    s = jnp.where(mask[None, None], -jnp.inf, s)
    p = jax.nn.softmax(s, axis=-1)
    ctx = jnp.einsum("bhqk,bhkd->bhqd", p, vb)
    ctx = ctx.transpose(2, 0, 1, 3).reshape(S, B, D)
    return ctx @ params["wo"] + params["bo"]


# ----------------------------------- main --------------------------------------

if __name__ == "__main__":
    d_model = 32
    n_heads = 4
    seq_len = 8
    batch = 2

    key = jax.random.PRNGKey(0)
    keys = jax.random.split(key, 9)
    w_scale = 1.0 / math.sqrt(d_model)

    # Deterministic synthetic parameters (weights stored as (Din, Dout), i.e.
    # already transposed relative to nn.Linear's (out, in) convention).
    params = {
        "wq": jax.random.normal(keys[0], (d_model, d_model), jnp.float32) * w_scale,
        "bq": jax.random.normal(keys[1], (d_model,), jnp.float32) * w_scale,
        "wk": jax.random.normal(keys[2], (d_model, d_model), jnp.float32) * w_scale,
        "bk": jax.random.normal(keys[3], (d_model,), jnp.float32) * w_scale,
        "wv": jax.random.normal(keys[4], (d_model, d_model), jnp.float32) * w_scale,
        "bv": jax.random.normal(keys[5], (d_model,), jnp.float32) * w_scale,
        "wo": jax.random.normal(keys[6], (d_model, d_model), jnp.float32) * w_scale,
        "bo": jax.random.normal(keys[7], (d_model,), jnp.float32) * w_scale,
    }

    x = jax.random.normal(keys[8], (seq_len, batch, d_model), jnp.float32)

    # Performance path: bf16 MXU operands, f32 accumulation.
    out = multi_head_attention(x, params, n_heads)
    out = jax.block_until_ready(out)

    # Verification path: same kernel with f32 operands (tight check of the logic).
    out_f32 = multi_head_attention(x, params, n_heads, compute_dtype=jnp.float32)
    out_f32 = jax.block_until_ready(out_f32)

    ref = multi_head_attention_ref(x, params, n_heads)

    assert out.shape == (seq_len, batch, d_model)
    assert jnp.allclose(out_f32, ref, atol=1e-4, rtol=1e-4), "f32 path mismatch vs reference"
    assert jnp.allclose(out, ref, atol=1e-1, rtol=5e-2), "bf16 path mismatch vs reference"

    print("KERNEL_OK")
</pallas_src>

<mosaic_0001>
module attributes {stable_mosaic.version = 11 : i64} {
  func.func @_fused_mha_kernel(%arg0: i32, %arg1: memref<1x8x32xf32, #tpu.memory_space<vmem>>, %arg2: memref<32x96xbf16, #tpu.memory_space<vmem>>, %arg3: memref<1x96xf32, #tpu.memory_space<vmem>>, %arg4: memref<32x32xbf16, #tpu.memory_space<vmem>>, %arg5: memref<1x32xf32, #tpu.memory_space<vmem>>, %arg6: memref<1x8x32xf32, #tpu.memory_space<vmem>>) attributes {dimension_semantics = [#tpu.dimension_semantics<parallel>], iteration_bounds = array<i64: 2>, scalar_prefetch = 0 : i64, scratch_operands = 0 : i64, tpu.core_type = #tpu.core_type<tc>, window_params = [{transform_indices = @transform_0, window_bounds = array<i64: 1, 8, 32>}, {pipeline_mode = #tpu.pipeline_mode<synchronous>, transform_indices = @transform_1, window_bounds = array<i64: 32, 96>}, {pipeline_mode = #tpu.pipeline_mode<synchronous>, transform_indices = @transform_2, window_bounds = array<i64: 1, 96>}, {pipeline_mode = #tpu.pipeline_mode<synchronous>, transform_indices = @transform_3, window_bounds = array<i64: 32, 32>}, {pipeline_mode = #tpu.pipeline_mode<synchronous>, transform_indices = @transform_4, window_bounds = array<i64: 1, 32>}, {transform_indices = @transform_5, window_bounds = array<i64: 1, 8, 32>}]} {
    %c0 = arith.constant 0 : index
    %c0_0 = arith.constant 0 : index
    %c0_1 = arith.constant 0 : index
    %0 = vector.load %arg1[%c0, %c0_0, %c0_1] : memref<1x8x32xf32, #tpu.memory_space<vmem>>, vector<1x8x32xf32>
    %1 = vector.shape_cast %0 : vector<1x8x32xf32> to vector<8x32xf32>
    %2 = arith.truncf %1 : vector<8x32xf32> to vector<8x32xbf16>
    %c0_2 = arith.constant 0 : index
    %c0_3 = arith.constant 0 : index
    %3 = vector.load %arg2[%c0_2, %c0_3] : memref<32x96xbf16, #tpu.memory_space<vmem>>, vector<32x96xbf16>
    %cst = arith.constant dense<0.000000e+00> : vector<8x96xf32>
    %4 = tpu.matmul %2, %3, %cst {dimension_numbers = #tpu.dot_dimension_numbers<[1], [0], [0], [1], [0, 0, 1, 1], [], []>} : vector<8x32xbf16>, vector<32x96xbf16>, vector<8x96xf32> -> vector<8x96xf32>
    %c0_4 = arith.constant 0 : index
    %c0_5 = arith.constant 0 : index
    %5 = vector.load %arg3[%c0_4, %c0_5] : memref<1x96xf32, #tpu.memory_space<vmem>>, vector<1x96xf32>
    %6 = vector.broadcast %5 : vector<1x96xf32> to vector<8x96xf32>
    %7 = arith.addf %4, %6 : vector<8x96xf32>
    %8 = tpu.iota {dimensions = array<i32: 0>} : vector<8x8xi32>
    %9 = tpu.iota {dimensions = array<i32: 1>} : vector<8x8xi32>
    %10 = arith.cmpi sle, %9, %8 : vector<8x8xi32>
    %11 = vector.extract_strided_slice %7 {offsets = [0, 0], sizes = [8, 8], strides = [1, 1]} : vector<8x96xf32> to vector<8x8xf32>
    %cst_6 = arith.constant 0.353553385 : f32
    %12 = vector.broadcast %cst_6 : f32 to vector<8x8xf32>
    %13 = arith.mulf %11, %12 : vector<8x8xf32>
    %14 = arith.truncf %13 : vector<8x8xf32> to vector<8x8xbf16>
    %15 = vector.extract_strided_slice %7 {offsets = [0, 32], sizes = [8, 8], strides = [1, 1]} : vector<8x96xf32> to vector<8x8xf32>
    %16 = arith.truncf %15 : vector<8x8xf32> to vector<8x8xbf16>
    %17 = vector.extract_strided_slice %7 {offsets = [0, 64], sizes = [8, 8], strides = [1, 1]} : vector<8x96xf32> to vector<8x8xf32>
    %18 = arith.truncf %17 : vector<8x8xf32> to vector<8x8xbf16>
    %cst_7 = arith.constant dense<0.000000e+00> : vector<8x8xf32>
    %19 = tpu.matmul %14, %16, %cst_7 {dimension_numbers = #tpu.dot_dimension_numbers<[1], [1], [0], [0], [0, 0, 1, 0], [], []>} : vector<8x8xbf16>, vector<8x8xbf16>, vector<8x8xf32> -> vector<8x8xf32>
    %cst_8 = arith.constant 0xFF800000 : f32
    %20 = vector.broadcast %cst_8 : f32 to vector<8x8xf32>
    %21 = arith.select %10, %19, %20 : vector<8x8xi1>, vector<8x8xf32>
    %cst_9 = arith.constant dense<0xFF800000> : vector<8xf32>
    %22 = vector.multi_reduction <maximumf>, %21, %cst_9 [1] : vector<8x8xf32> to vector<8xf32>
    %23 = vector.shape_cast %22 : vector<8xf32> to vector<8x1xf32>
    %24 = vector.broadcast %23 : vector<8x1xf32> to vector<8x8xf32>
    %25 = arith.subf %21, %24 : vector<8x8xf32>
    %26 = math.exp %25 : vector<8x8xf32>
    %cst_10 = arith.constant dense<0.000000e+00> : vector<8xf32>
    %27 = vector.multi_reduction <add>, %26, %cst_10 [1] : vector<8x8xf32> to vector<8xf32>
    %28 = vector.shape_cast %27 : vector<8xf32> to vector<8x1xf32>
    %29 = tpu.reciprocal %28 {approx = true} : vector<8x1xf32> -> vector<8x1xf32>
    %30 = vector.broadcast %29 : vector<8x1xf32> to vector<8x8xf32>
    %31 = arith.mulf %26, %30 : vector<8x8xf32>
    %32 = arith.truncf %31 : vector<8x8xf32> to vector<8x8xbf16>
    %cst_11 = arith.constant dense<0.000000e+00> : vector<8x8xf32>
    %33 = tpu.matmul %32, %18, %cst_11 {dimension_numbers = #tpu.dot_dimension_numbers<[1], [0], [0], [1], [0, 0, 1, 1], [], []>} : vector<8x8xbf16>, vector<8x8xbf16>, vector<8x8xf32> -> vector<8x8xf32>
    %34 = vector.extract_strided_slice %7 {offsets = [0, 8], sizes = [8, 8], strides = [1, 1]} : vector<8x96xf32> to vector<8x8xf32>
    %cst_12 = arith.constant 0.353553385 : f32
    %35 = vector.broadcast %cst_12 : f32 to vector<8x8xf32>
    %36 = arith.mulf %34, %35 : vector<8x8xf32>
    %37 = arith.truncf %36 : vector<8x8xf32> to vector<8x8xbf16>
    %38 = vector.extract_strided_slice %7 {offsets = [0, 40], sizes = [8, 8], strides = [1, 1]} : vector<8x96xf32> to vector<8x8xf32>
    %39 = arith.truncf %38 : vector<8x8xf32> to vector<8x8xbf16>
    %40 = vector.extract_strided_slice %7 {offsets = [0, 72], sizes = [8, 8], strides = [1, 1]} : vector<8x96xf32> to vector<8x8xf32>
    %41 = arith.truncf %40 : vector<8x8xf32> to vector<8x8xbf16>
    %cst_13 = arith.constant dense<0.000000e+00> : vector<8x8xf32>
    %42 = tpu.matmul %37, %39, %cst_13 {dimension_numbers = #tpu.dot_dimension_numbers<[1], [1], [0], [0], [0, 0, 1, 0], [], []>} : vector<8x8xbf16>, vector<8x8xbf16>, vector<8x8xf32> -> vector<8x8xf32>
    %cst_14 = arith.constant 0xFF800000 : f32
    %43 = vector.broadcast %cst_14 : f32 to vector<8x8xf32>
    %44 = arith.select %10, %42, %43 : vector<8x8xi1>, vector<8x8xf32>
    %cst_15 = arith.constant dense<0xFF800000> : vector<8xf32>
    %45 = vector.multi_reduction <maximumf>, %44, %cst_15 [1] : vector<8x8xf32> to vector<8xf32>
    %46 = vector.shape_cast %45 : vector<8xf32> to vector<8x1xf32>
    %47 = vector.broadcast %46 : vector<8x1xf32> to vector<8x8xf32>
    %48 = arith.subf %44, %47 : vector<8x8xf32>
    %49 = math.exp %48 : vector<8x8xf32>
    %cst_16 = arith.constant dense<0.000000e+00> : vector<8xf32>
    %50 = vector.multi_reduction <add>, %49, %cst_16 [1] : vector<8x8xf32> to vector<8xf32>
    %51 = vector.shape_cast %50 : vector<8xf32> to vector<8x1xf32>
    %52 = tpu.reciprocal %51 {approx = true} : vector<8x1xf32> -> vector<8x1xf32>
    %53 = vector.broadcast %52 : vector<8x1xf32> to vector<8x8xf32>
    %54 = arith.mulf %49, %53 : vector<8x8xf32>
    %55 = arith.truncf %54 : vector<8x8xf32> to vector<8x8xbf16>
    %cst_17 = arith.constant dense<0.000000e+00> : vector<8x8xf32>
    %56 = tpu.matmul %55, %41, %cst_17 {dimension_numbers = #tpu.dot_dimension_numbers<[1], [0], [0], [1], [0, 0, 1, 1], [], []>} : vector<8x8xbf16>, vector<8x8xbf16>, vector<8x8xf32> -> vector<8x8xf32>
    %57 = vector.extract_strided_slice %7 {offsets = [0, 16], sizes = [8, 8], strides = [1, 1]} : vector<8x96xf32> to vector<8x8xf32>
    %cst_18 = arith.constant 0.353553385 : f32
    %58 = vector.broadcast %cst_18 : f32 to vector<8x8xf32>
    %59 = arith.mulf %57, %58 : vector<8x8xf32>
    %60 = arith.truncf %59 : vector<8x8xf32> to vector<8x8xbf16>
    %61 = vector.extract_strided_slice %7 {offsets = [0, 48], sizes = [8, 8], strides = [1, 1]} : vector<8x96xf32> to vector<8x8xf32>
    %62 = arith.truncf %61 : vector<8x8xf32> to vector<8x8xbf16>
    %63 = vector.extract_strided_slice %7 {offsets = [0, 80], sizes = [8, 8], strides = [1, 1]} : vector<8x96xf32> to vector<8x8xf32>
    %64 = arith.truncf %63 : vector<8x8xf32> to vector<8x8xbf16>
    %cst_19 = arith.constant dense<0.000000e+00> : vector<8x8xf32>
    %65 = tpu.matmul %60, %62, %cst_19 {dimension_numbers = #tpu.dot_dimension_numbers<[1], [1], [0], [0], [0, 0, 1, 0], [], []>} : vector<8x8xbf16>, vector<8x8xbf16>, vector<8x8xf32> -> vector<8x8xf32>
    %cst_20 = arith.constant 0xFF800000 : f32
    %66 = vector.broadcast %cst_20 : f32 to vector<8x8xf32>
    %67 = arith.select %10, %65, %66 : vector<8x8xi1>, vector<8x8xf32>
    %cst_21 = arith.constant dense<0xFF800000> : vector<8xf32>
    %68 = vector.multi_reduction <maximumf>, %67, %cst_21 [1] : vector<8x8xf32> to vector<8xf32>
    %69 = vector.shape_cast %68 : vector<8xf32> to vector<8x1xf32>
    %70 = vector.broadcast %69 : vector<8x1xf32> to vector<8x8xf32>
    %71 = arith.subf %67, %70 : vector<8x8xf32>
    %72 = math.exp %71 : vector<8x8xf32>
    %cst_22 = arith.constant dense<0.000000e+00> : vector<8xf32>
    %73 = vector.multi_reduction <add>, %72, %cst_22 [1] : vector<8x8xf32> to vector<8xf32>
    %74 = vector.shape_cast %73 : vector<8xf32> to vector<8x1xf32>
    %75 = tpu.reciprocal %74 {approx = true} : vector<8x1xf32> -> vector<8x1xf32>
    %76 = vector.broadcast %75 : vector<8x1xf32> to vector<8x8xf32>
    %77 = arith.mulf %72, %76 : vector<8x8xf32>
    %78 = arith.truncf %77 : vector<8x8xf32> to vector<8x8xbf16>
    %cst_23 = arith.constant dense<0.000000e+00> : vector<8x8xf32>
    %79 = tpu.matmul %78, %64, %cst_23 {dimension_numbers = #tpu.dot_dimension_numbers<[1], [0], [0], [1], [0, 0, 1, 1], [], []>} : vector<8x8xbf16>, vector<8x8xbf16>, vector<8x8xf32> -> vector<8x8xf32>
    %80 = vector.extract_strided_slice %7 {offsets = [0, 24], sizes = [8, 8], strides = [1, 1]} : vector<8x96xf32> to vector<8x8xf32>
    %cst_24 = arith.constant 0.353553385 : f32
    %81 = vector.broadcast %cst_24 : f32 to vector<8x8xf32>
    %82 = arith.mulf %80, %81 : vector<8x8xf32>
    %83 = arith.truncf %82 : vector<8x8xf32> to vector<8x8xbf16>
    %84 = vector.extract_strided_slice %7 {offsets = [0, 56], sizes = [8, 8], strides = [1, 1]} : vector<8x96xf32> to vector<8x8xf32>
    %85 = arith.truncf %84 : vector<8x8xf32> to vector<8x8xbf16>
    %86 = vector.extract_strided_slice %7 {offsets = [0, 88], sizes = [8, 8], strides = [1, 1]} : vector<8x96xf32> to vector<8x8xf32>
    %87 = arith.truncf %86 : vector<8x8xf32> to vector<8x8xbf16>
    %cst_25 = arith.constant dense<0.000000e+00> : vector<8x8xf32>
    %88 = tpu.matmul %83, %85, %cst_25 {dimension_numbers = #tpu.dot_dimension_numbers<[1], [1], [0], [0], [0, 0, 1, 0], [], []>} : vector<8x8xbf16>, vector<8x8xbf16>, vector<8x8xf32> -> vector<8x8xf32>
    %cst_26 = arith.constant 0xFF800000 : f32
    %89 = vector.broadcast %cst_26 : f32 to vector<8x8xf32>
    %90 = arith.select %10, %88, %89 : vector<8x8xi1>, vector<8x8xf32>
    %cst_27 = arith.constant dense<0xFF800000> : vector<8xf32>
    %91 = vector.multi_reduction <maximumf>, %90, %cst_27 [1] : vector<8x8xf32> to vector<8xf32>
    %92 = vector.shape_cast %91 : vector<8xf32> to vector<8x1xf32>
    %93 = vector.broadcast %92 : vector<8x1xf32> to vector<8x8xf32>
    %94 = arith.subf %90, %93 : vector<8x8xf32>
    %95 = math.exp %94 : vector<8x8xf32>
    %cst_28 = arith.constant dense<0.000000e+00> : vector<8xf32>
    %96 = vector.multi_reduction <add>, %95, %cst_28 [1] : vector<8x8xf32> to vector<8xf32>
    %97 = vector.shape_cast %96 : vector<8xf32> to vector<8x1xf32>
    %98 = tpu.reciprocal %97 {approx = true} : vector<8x1xf32> -> vector<8x1xf32>
    %99 = vector.broadcast %98 : vector<8x1xf32> to vector<8x8xf32>
    %100 = arith.mulf %95, %99 : vector<8x8xf32>
    %101 = arith.truncf %100 : vector<8x8xf32> to vector<8x8xbf16>
    %cst_29 = arith.constant dense<0.000000e+00> : vector<8x8xf32>
    %102 = tpu.matmul %101, %87, %cst_29 {dimension_numbers = #tpu.dot_dimension_numbers<[1], [0], [0], [1], [0, 0, 1, 1], [], []>} : vector<8x8xbf16>, vector<8x8xbf16>, vector<8x8xf32> -> vector<8x8xf32>
    %103 = tpu.concatenate %33, %56, %79, %102 in 1 : vector<8x8xf32>, vector<8x8xf32>, vector<8x8xf32>, vector<8x8xf32> -> vector<8x32xf32>
    %104 = arith.truncf %103 : vector<8x32xf32> to vector<8x32xbf16>
    %c0_30 = arith.constant 0 : index
    %c0_31 = arith.constant 0 : index
    %105 = vector.load %arg4[%c0_30, %c0_31] : memref<32x32xbf16, #tpu.memory_space<vmem>>, vector<32x32xbf16>
    %cst_32 = arith.constant dense<0.000000e+00> : vector<8x32xf32>
    %106 = tpu.matmul %104, %105, %cst_32 {dimension_numbers = #tpu.dot_dimension_numbers<[1], [0], [0], [1], [0, 0, 1, 1], [], []>} : vector<8x32xbf16>, vector<32x32xbf16>, vector<8x32xf32> -> vector<8x32xf32>
    %c0_33 = arith.constant 0 : index
    %c0_34 = arith.constant 0 : index
    %107 = vector.load %arg5[%c0_33, %c0_34] : memref<1x32xf32, #tpu.memory_space<vmem>>, vector<1x32xf32>
    %108 = vector.broadcast %107 : vector<1x32xf32> to vector<8x32xf32>
    %109 = arith.addf %106, %108 : vector<8x32xf32>
    %c0_35 = arith.constant 0 : index
    %c0_36 = arith.constant 0 : index
    %c0_37 = arith.constant 0 : index
    %110 = vector.load %arg6[%c0_35, %c0_36, %c0_37] : memref<1x8x32xf32, #tpu.memory_space<vmem>>, vector<1x8x32xf32>
    %111 = vector.shape_cast %110 : vector<1x8x32xf32> to vector<8x32xf32>
    %112 = vector.shape_cast %109 : vector<8x32xf32> to vector<1x8x32xf32>
    tpu.vector_store %arg6[%c0_35, %c0_36, %c0_37], %112 {strides = array<i32>} : memref<1x8x32xf32, #tpu.memory_space<vmem>>, vector<1x8x32xf32>,
    return
  }
  func.func @transform_0(%arg0: i32) -> (i32, i32, i32) {
    %c0_i32 = arith.constant 0 : i32
    %c0_i32_0 = arith.constant 0 : i32
    %c0_i32_1 = arith.constant 0 : i32
    return %arg0, %c0_i32, %c0_i32_0 : i32, i32, i32
  }
  func.func @transform_1(%arg0: i32) -> (i32, i32) {
    %c0_i32 = arith.constant 0 : i32
    %c0_i32_0 = arith.constant 0 : i32
    %c0_i32_1 = arith.constant 0 : i32
    return %c0_i32, %c0_i32_0 : i32, i32
  }
  func.func @transform_2(%arg0: i32) -> (i32, i32) {
    %c0_i32 = arith.constant 0 : i32
    %c0_i32_0 = arith.constant 0 : i32
    %c0_i32_1 = arith.constant 0 : i32
    return %c0_i32, %c0_i32_0 : i32, i32
  }
  func.func @transform_3(%arg0: i32) -> (i32, i32) {
    %c0_i32 = arith.constant 0 : i32
    %c0_i32_0 = arith.constant 0 : i32
    %c0_i32_1 = arith.constant 0 : i32
    return %c0_i32, %c0_i32_0 : i32, i32
  }
  func.func @transform_4(%arg0: i32) -> (i32, i32) {
    %c0_i32 = arith.constant 0 : i32
    %c0_i32_0 = arith.constant 0 : i32
    %c0_i32_1 = arith.constant 0 : i32
    return %c0_i32, %c0_i32_0 : i32, i32
  }
  func.func @transform_5(%arg0: i32) -> (i32, i32, i32) {
    %c0_i32 = arith.constant 0 : i32
    %c0_i32_0 = arith.constant 0 : i32
    %c0_i32_1 = arith.constant 0 : i32
    return %arg0, %c0_i32, %c0_i32_0 : i32, i32, i32
  }
}

</mosaic_0001>

<llo_original>
// kernel: tpu_custom_call.1
$region0: #{tpu_custom_call.1}
  #allocation0 [shape = 'u32[]', space=smem, size = 0x4, offset = 0x4, fixed_abs, tag = 'smem constant byte address 0x4 - core index']
  #allocation1 [shape = 'u32[144,128]{1,0:T(1,128)}', space=vmem, size = 0x12000, scoped, tag = 'internal scratch']
  %s0 = inlined_call_operand.hbm [shape: f32[2,8,32], index: 0, kind: input, shape index: {}]
  %s1 = inlined_call_operand.hbm [shape: bf16[32,96], index: 1, kind: input, shape index: {}]
  %s2 = inlined_call_operand.vmem [shape: f32[1,96], index: 2, kind: input, shape index: {}]
  %s3 = inlined_call_operand.hbm [shape: bf16[32,32], index: 3, kind: input, shape index: {}]
  %s4 = inlined_call_operand.vmem [shape: f32[1,32], index: 4, kind: input, shape index: {}]
  %s5 = inlined_call_operand.hbm [shape: f32[2,8,32], index: 5, kind: output, shape index: {}]
  %s6 = sld [smem:[#allocation0]]
  $region65: #{tpu_custom_call.1} parent=0
    _
  %s8 = ssub.s32 1, %s6
  %s9 = scalar_select 0, %s8, %s6
  $region1: #{tpu_custom_call.1} parent=0
    #allocation2 [shape = 'u8[8192]{0}', space=vmem, size = 0x2000, scoped, tag = 'input window, operand 0']
    #allocation3 [shape = 's32[2]{0}', space=sflag, size = 0x8, scoped, tag = 'scoped memory for tpu_custom_call.1']
    #allocation4 [shape = 's32[2]{0}', space=sflag, size = 0x8, scoped, tag = 'scoped memory for tpu_custom_call.1']
    #allocation5 [shape = 'u8[8192]{0}', space=vmem, size = 0x2000, scoped, tag = 'input window, operand 1, single buffered']
    #allocation6 [shape = 's32[1]{0}', space=sflag, size = 0x4, scoped, tag = 'scoped memory for tpu_custom_call.1']
    #allocation7 [shape = 'u8[8192]{0}', space=vmem, size = 0x2000, scoped, tag = 'input window, operand 3, single buffered']
    #allocation8 [shape = 'u8[8192]{0}', space=vmem, size = 0x2000, scoped, tag = 'output window, operand 0']
    %10 = vsyncpa [#allocation3], 0
    %s11 = scalar_lea.sflag [#allocation3], 1
    %12 = vsyncpa %s11, 0
    %13 = vsyncpa [#allocation6], 0
    %14 = vsyncpa [#allocation4], 0
    %s15 = scalar_lea.sflag [#allocation4], 1
    %16 = vsyncpa %s15, 0
    loop: start=0, step=1, limit=4
    $region2: #{tpu_custom_call.1} parent=1 // loop_pre_header
      _
    $region3: #{tpu_custom_call.1} parent=1 // loop_header
      %s18 = sphi 0, %s22
      %p19 = scmp.ge.s32.totalorder %s18, 4
      %s28 = sphi 0, %s30
      %s31 = sphi 0, %s28
      %s32 = sphi 0, %s31
      %s48 = sphi 0, %s32
      %s52 = sphi 0, %s52
      %s54 = sphi 0, %s52
      %s55 = sphi 0, %s54
      %s69 = sphi 0, %s55
      %s73 = sphi 0, %s73
      %s75 = sphi 0, %s73
      %s76 = sphi 0, %s75
      %s90 = sphi 0, %s76
      %s94 = sphi 0, %s94
      %s96 = sphi 0, %s94
      %s97 = sphi 0, %s96
      %s111 = sphi 0, %s97
      %s115 = sphi 0, %s115
      %s117 = sphi 0, %s115
      %s118 = sphi 0, %s117
      %s132 = sphi 0, %s118
      %s138 = sphi 0, %s140
      %s141 = sphi 0, %s138
      %s142 = sphi 0, %s141
      %s158 = sphi 0, %s142
    $region4: #{tpu_custom_call.1} parent=1 // loop_header_branch
      %21 = sbr.rel (%p19) target = $region8
    $region5: #{tpu_custom_call.1} parent=1 // loop_body
      %s23 = ssub.s32 %s18, 1
      %s24 = ssub.s32 %s18, 2
      %s25 = sadd.s32 %s18, 1
      %s26 = ssub.s32 %s18, %s25
      %p27 = scmp.eq.s32.totalorder %s26, 0
      %s29 = sadd.s32 %s28, 1
      %s30 = scalar_select %p27, %s28, %s29
      %p33 = pneg %p27
      %p34 = scmp.eq.s32.totalorder %s18, 1
      %p35 = por %p33, %p34
      %p36 = scmp.ne.s32.totalorder %s28, %s31
      %p37 = scmp.eq.s32.totalorder %s18, 0
      %p38 = por %p36, %p37
      %p39 = scmp.ne.s32.totalorder %s28, %s31
      %p40 = scmp.eq.s32.totalorder %s23, 1
      %p41 = por %p39, %p40
      %p42 = scmp.ne.s32.totalorder %s31, %s32
      %p43 = scmp.eq.s32.totalorder %s23, 0
      %p44 = por %p42, %p43
      %p45 = scmp.ne.s32.totalorder %s31, %s32
      %p46 = scmp.eq.s32.totalorder %s24, 1
      %p47 = por %p45, %p46
      %p49 = scmp.ne.s32.totalorder %s32, %s48
      %p50 = scmp.eq.s32.totalorder %s24, 0
      %p51 = por %p49, %p50
      %s53 = sadd.s32 %s52, 1
      %p56 = scmp.eq.s32.totalorder %s18, 1
      %p57 = scmp.ne.s32.totalorder %s52, %s54
      %p58 = scmp.eq.s32.totalorder %s18, 0
      %p59 = por %p57, %p58
      %p60 = scmp.ne.s32.totalorder %s52, %s54
      %p61 = scmp.eq.s32.totalorder %s23, 1
      %p62 = por %p60, %p61
      %p63 = scmp.ne.s32.totalorder %s54, %s55
      %p64 = scmp.eq.s32.totalorder %s23, 0
      %p65 = por %p63, %p64
      %p66 = scmp.ne.s32.totalorder %s54, %s55
      %p67 = scmp.eq.s32.totalorder %s24, 1
      %p68 = por %p66, %p67
      %p70 = scmp.ne.s32.totalorder %s55, %s69
      %p71 = scmp.eq.s32.totalorder %s24, 0
      %p72 = por %p70, %p71
      %s74 = sadd.s32 %s73, 1
      %p77 = scmp.eq.s32.totalorder %s18, 1
      %p78 = scmp.ne.s32.totalorder %s73, %s75
      %p79 = scmp.eq.s32.totalorder %s18, 0
      %p80 = por %p78, %p79
      %p81 = scmp.ne.s32.totalorder %s73, %s75
      %p82 = scmp.eq.s32.totalorder %s23, 1
      %p83 = por %p81, %p82
      %p84 = scmp.ne.s32.totalorder %s75, %s76
      %p85 = scmp.eq.s32.totalorder %s23, 0
      %p86 = por %p84, %p85
      %p87 = scmp.ne.s32.totalorder %s75, %s76
      %p88 = scmp.eq.s32.totalorder %s24, 1
      %p89 = por %p87, %p88
      %p91 = scmp.ne.s32.totalorder %s76, %s90
      %p92 = scmp.eq.s32.totalorder %s24, 0
      %p93 = por %p91, %p92
      %s95 = sadd.s32 %s94, 1
      %p98 = scmp.eq.s32.totalorder %s18, 1
      %p99 = scmp.ne.s32.totalorder %s94, %s96
      %p100 = scmp.eq.s32.totalorder %s18, 0
      %p101 = por %p99, %p100
      %p102 = scmp.ne.s32.totalorder %s94, %s96
      %p103 = scmp.eq.s32.totalorder %s23, 1
      %p104 = por %p102, %p103
      %p105 = scmp.ne.s32.totalorder %s96, %s97
      %p106 = scmp.eq.s32.totalorder %s23, 0
      %p107 = por %p105, %p106
      %p108 = scmp.ne.s32.totalorder %s96, %s97
      %p109 = scmp.eq.s32.totalorder %s24, 1
      %p110 = por %p108, %p109
      %p112 = scmp.ne.s32.totalorder %s97, %s111
      %p113 = scmp.eq.s32.totalorder %s24, 0
      %p114 = por %p112, %p113
      %s116 = sadd.s32 %s115, 1
      %p119 = scmp.eq.s32.totalorder %s18, 1
      %p120 = scmp.ne.s32.totalorder %s115, %s117
      %p121 = scmp.eq.s32.totalorder %s18, 0
      %p122 = por %p120, %p121
      %p123 = scmp.ne.s32.totalorder %s115, %s117
      %p124 = scmp.eq.s32.totalorder %s23, 1
      %p125 = por %p123, %p124
      %p126 = scmp.ne.s32.totalorder %s117, %s118
      %p127 = scmp.eq.s32.totalorder %s23, 0
      %p128 = por %p126, %p127
      %p129 = scmp.ne.s32.totalorder %s117, %s118
      %p130 = scmp.eq.s32.totalorder %s24, 1
      %p131 = por %p129, %p130
      %p133 = scmp.ne.s32.totalorder %s118, %s132
      %p134 = scmp.eq.s32.totalorder %s24, 0
      %p135 = por %p133, %p134
      %s136 = ssub.s32 %s18, %s25
      %p137 = scmp.eq.s32.totalorder %s136, 0
      %s139 = sadd.s32 %s138, 1
      %s140 = scalar_select %p137, %s138, %s139
      %p143 = pneg %p137
      %p144 = scmp.eq.s32.totalorder %s18, 1
      %p145 = por %p143, %p144
      %p146 = scmp.ne.s32.totalorder %s138, %s141
      %p147 = scmp.eq.s32.totalorder %s18, 0
      %p148 = por %p146, %p147
      %p149 = scmp.ne.s32.totalorder %s138, %s141
      %p150 = scmp.eq.s32.totalorder %s23, 1
      %p151 = por %p149, %p150
      %p152 = scmp.ne.s32.totalorder %s141, %s142
      %p153 = scmp.eq.s32.totalorder %s23, 0
      %p154 = por %p152, %p153
      %p155 = scmp.ne.s32.totalorder %s141, %s142
      %p156 = scmp.eq.s32.totalorder %s24, 1
      %p157 = por %p155, %p156
      %p159 = scmp.ne.s32.totalorder %s142, %s158
      %p160 = scmp.eq.s32.totalorder %s24, 0
      %p161 = por %p159, %p160
      %p162 = scmp.le.s32.totalorder 1, %s18
      %p163 = scmp.lt.s32.totalorder %s18, 3
      %p164 = pnand %p162, %p163
      %p165 = pneg %p164
      // Predicated region
      $region9: #{tpu_custom_call.1} parent=5 // pred_check
        _
      $region10: #{tpu_custom_call.1} parent=5 // pred_check_branch
        %167 = sbr.rel (%p164) target = $region12
      $region11: #{tpu_custom_call.1} parent=5 // pred_region
        %s168 = ssub.s32 %s18, 1
        // Predicated region
        $region13: #{tpu_custom_call.1} parent=11 // pred_check
          %p169 = pneg %p65
        $region14: #{tpu_custom_call.1} parent=11 // pred_check_branch
          %171 = sbr.rel (%p169) target = $region16
        $region15: #{tpu_custom_call.1} parent=11 // pred_region
          %s173 = ssub.s32 256, 256
          %174 = vsyncadd [#allocation6], %s173
          %s175 = sshll.u32 [#allocation5], 4
          %s176 = int_to_ptr.vmem [resolvable:$true] %s175
          %181 = dma.hbm_to_vmem [thread:$0]  %s1, 256, %s176, [#allocation6], 64, 64, 4
        $region16: #{tpu_custom_call.1} parent=11 // pred_fallthru
          _
        // Predicated region
        $region17: #{tpu_custom_call.1} parent=11 // pred_check
          %p182 = pneg %p86
        $region18: #{tpu_custom_call.1} parent=11 // pred_check_branch
          %184 = sbr.rel (%p182) target = $region20
        $region19: #{tpu_custom_call.1} parent=11 // pred_region
          _
        $region20: #{tpu_custom_call.1} parent=11 // pred_fallthru
          _
        // Predicated region
        $region21: #{tpu_custom_call.1} parent=11 // pred_check
          %p185 = pneg %p107
        $region22: #{tpu_custom_call.1} parent=11 // pred_check_branch
          %187 = sbr.rel (%p185) target = $region24
        $region23: #{tpu_custom_call.1} parent=11 // pred_region
          %s189 = ssub.s32 256, 256
          %190 = vsyncadd [#allocation6], %s189
          %s191 = sshll.u32 [#allocation7], 4
          %s192 = int_to_ptr.vmem [resolvable:$true] %s191
          %197 = dma.hbm_to_vmem [thread:$0]  %s3, 256, %s192, [#allocation6], 64, 64, 4
        $region24: #{tpu_custom_call.1} parent=11 // pred_fallthru
          _
        // Predicated region
        $region25: #{tpu_custom_call.1} parent=11 // pred_check
          %p198 = pneg %p128
        $region26: #{tpu_custom_call.1} parent=11 // pred_check_branch
          %200 = sbr.rel (%p198) target = $region28
        $region27: #{tpu_custom_call.1} parent=11 // pred_region
          _
        $region28: #{tpu_custom_call.1} parent=11 // pred_fallthru
          _
      $region12: #{tpu_custom_call.1} parent=5 // pred_fallthru
        _
      %p201 = scmp.lt.s32.totalorder %s18, 2
      // Predicated region
      $region29: #{tpu_custom_call.1} parent=5 // pred_check
        %p202 = pneg %p201
      $region30: #{tpu_custom_call.1} parent=5 // pred_check_branch
        %204 = sbr.rel (%p202) target = $region32
      $region31: #{tpu_custom_call.1} parent=5 // pred_region
        // Predicated region
        $region33: #{tpu_custom_call.1} parent=31 // pred_check
          %p205 = pneg %p38
        $region34: #{tpu_custom_call.1} parent=31 // pred_check_branch
          %207 = sbr.rel (%p205) target = $region36
        $region35: #{tpu_custom_call.1} parent=31 // pred_region
          %s208 = sand.u32 %s28, 1
          %s209 = scalar_lea.sflag [#allocation3], %s208
          %s210 = sand.u32 %s28, 1
          %s211 = smul.addr %s210, 8
          %s212 = scalar_lea.vmem [#allocation2], %s211
          %s214 = ssub.s32 128, 128
          %215 = vsyncadd %s209, %s214
          %s216 = smul.addr %s18, 128
          %s217 = scalar_lea.hbm %s0, %s216
          %s219 = sshll.u32 %s212, 4
          %s220 = int_to_ptr.vmem [resolvable:$true] %s219
          %222 = dma.hbm_to_vmem [thread:$0]  %s217, 128, %s220, %s209
        $region36: #{tpu_custom_call.1} parent=31 // pred_fallthru
          _
      $region32: #{tpu_custom_call.1} parent=5 // pred_fallthru
        _
      %p223 = scmp.le.s32.totalorder 1, %s18
      %p224 = scmp.lt.s32.totalorder %s18, 3
      %p225 = pnand %p223, %p224
      %p226 = pneg %p225
      // Predicated region
      $region37: #{tpu_custom_call.1} parent=5 // pred_check
        _
      $region38: #{tpu_custom_call.1} parent=5 // pred_check_branch
        %228 = sbr.rel (%p225) target = $region40
      $region39: #{tpu_custom_call.1} parent=5 // pred_region
        %s229 = ssub.s32 %s18, 1
        %s230 = sand.u32 %s31, 1
        %s231 = scalar_lea.sflag [#allocation3], %s230
        %s232 = sand.u32 %s31, 1
        %s233 = smul.addr %s232, 8
        %s234 = scalar_lea.vmem [#allocation2], %s233
        // Predicated region
        $region41: #{tpu_custom_call.1} parent=39 // pred_check
          %p235 = pneg %p44
        $region42: #{tpu_custom_call.1} parent=39 // pred_check_branch
          %237 = sbr.rel (%p235) target = $region44
        $region43: #{tpu_custom_call.1} parent=39 // pred_region
          %238 = dma.done %s231, 128
        $region44: #{tpu_custom_call.1} parent=39 // pred_fallthru
          _
        // Predicated region
        $region45: #{tpu_custom_call.1} parent=39 // pred_check
          %p239 = pneg %p65
        $region46: #{tpu_custom_call.1} parent=39 // pred_check_branch
          %241 = sbr.rel (%p239) target = $region48
        $region47: #{tpu_custom_call.1} parent=39 // pred_region
          %242 = dma.done [#allocation6], 256
        $region48: #{tpu_custom_call.1} parent=39 // pred_fallthru
          _
        // Predicated region
        $region49: #{tpu_custom_call.1} parent=39 // pred_check
          %p243 = pneg %p107
        $region50: #{tpu_custom_call.1} parent=39 // pred_check_branch
          %245 = sbr.rel (%p243) target = $region52
        $region51: #{tpu_custom_call.1} parent=39 // pred_region
          %246 = dma.done [#allocation6], 256
        $region52: #{tpu_custom_call.1} parent=39 // pred_fallthru
          _
        %s247 = sand.u32 %s31, 1
        %s248 = scalar_lea.sflag [#allocation3], %s247
        %s249 = sand.u32 %s31, 1
        %s250 = smul.addr %s249, 8
        %s251 = scalar_lea.vmem [#allocation2], %s250
        %p252 = pneg %p44
        %p253 = pneg %p41
        %p254 = pneg %p65
        %p255 = pneg %p62
        %p256 = pneg %p86
        %p257 = pneg %p83
        %p258 = pneg %p107
        %p259 = pneg %p104
        %p260 = pneg %p128
        %p261 = pneg %p125
        %p262 = pneg %p154
        %p263 = pneg %p151
        %s264 = sand.u32 %s141, 1
        %s265 = scalar_lea.sflag [#allocation4], %s264
        %s266 = sand.u32 %s141, 1
        %s267 = smul.addr %s266, 8
        %s268 = scalar_lea.vmem [#allocation8], %s267
        %v270 = vld [vmem:[%s234] sm:$0xff]
        %v271 = vpack.c.bf16 %v270, %v270
        %v272 = vld [vmem:[#allocation5] sm:$0xf]
        %v273 = vld [vmem:[#allocation5 + $0x4] sm:$0xf]
        %v274 = vld [vmem:[#allocation5 + $0x8] sm:$0xf]
        %v275 = vld [vmem:[#allocation5 + $0xc] sm:$0xf]
        %v276 = vld [vmem:[%s2] sm:$0x1]
        %v278 = vlaneseq
        %v279 = vshrl.u32 %v278, 7
        %v280 = vsub.s32 0, %v279
        %v281 = vrot.slane %v276, %v280
        %v287 = vunpack.c.l.b16 %v272
        %v288 = vunpack.c.l.b16 %v273
        %v289 = vunpack.c.l.b16 %v274
        %v290 = vunpack.c.l.b16 %v275
        %v291 = vpack.c.b16 %v288, %v287
        %v292 = vpack.c.b16 %v290, %v289
        %vm295 = vcmask 261120
        %v297 = vsel %vm295, %v271, 0
        %299 = vmatprep.subr.bf16.mxu0 0
        %300 = vmatpush1.bf16.msra.mxu0 %v291
        %301 = vmatprep.subr.bf16.mxu0 0
        %302 = vmatpush1.bf16.msra.mxu0 %v292
        %303 = vmatprep.subr.bf16.mxu0 0
        %304 = vmatpush1.bf16.msra.mxu0 0
        %305 = vmatprep.subr.bf16.mxu0 0
        %306 = vmatpush1.bf16.msra.mxu0 0
        %307 = vmatprep.subr.bf16.mxu0 0
        %308 = vmatpush1.bf16.msra.mxu0 0
        %309 = vmatprep.subr.bf16.mxu0 0
        %310 = vmatpush1.bf16.msra.mxu0 0
        %311 = vmatprep.subr.bf16.mxu0 0
        %312 = vmatpush1.bf16.msra.mxu0 0
        %313 = vmatprep.subr.bf16.mxu0 0
        %314 = vmatpush1.bf16.msra.mxu0 0
        %315 = vmatprep.subr.bf16.mxu0 0
        %316 = vmatpush1.bf16.msra.mxu0 0
        %317 = vmatprep.subr.bf16.mxu0 0
        %318 = vmatpush1.bf16.msra.mxu0 0
        %319 = vmatprep.subr.bf16.mxu0 0
        %320 = vmatpush1.bf16.msra.mxu0 0
        %321 = vmatprep.subr.bf16.mxu0 0
        %322 = vmatpush1.bf16.msra.mxu0 0
        %323 = vmatprep.subr.bf16.mxu0 0
        %324 = vmatpush1.bf16.msra.mxu0 0
        %325 = vmatprep.subr.bf16.mxu0 0
        %326 = vmatpush1.bf16.msra.mxu0 0
        %327 = vmatprep.subr.bf16.mxu0 0
        %328 = vmatpush1.bf16.msra.mxu0 0
        %329 = vmatprep.subr.bf16.mxu0 0
        %330 = vmatpush1.bf16.msra.mxu0 0
        %331 = vmatprep.mubr.bf16.mxu0 0
        %332 = vmatmul.mubr.bf16.gmra.mrb[0].mxu0 %v297
        %v333 = vpop.f32.mrb[0].mxu0
        %v334 = vadd.f32 %v281, %v333
        %v335 = vpop.f32.mrb[0].mxu0
        %v336 = vpop.f32.mrb[0].mxu0
        %v337 = vpop.f32.mrb[0].mxu0
        %338 = vdwg.mxu0
        %v339 = vlaneseq
        %v340 = vshrl.u32 %v339, 7
        %v341 = vlaneseq
        %v342 = vand.u32 %v341, 127
        %vm343 = vcmp.le.s32.totalorder %v342, %v340
        %v344 = vmul.f32 %v334, 0.35355338
        %v345 = vpack.c.bf16 %v344, %v344
        %v346 = vpack.c.bf16 %v334, %v334
        %348 = vrot.lane.b32.xlu0 %v346, 96
        %v349 = vpop.permute.xlu0 %348
        %vm350 = vcmask 64512
        %v352 = vsel %vm350, %v345, 0
        %v355 = vsel %vm350, %v349, 0
        %357 = vmatprep.subr.bf16.mxu0 0
        %358 = vmatpush1.bf16.xpose.msra.mxu0 %v355
        %359 = vmatprep.subr.bf16.mxu0 0
        %360 = vmatpush1.bf16.xpose.msra.mxu0 0
        %361 = vmatprep.subr.bf16.mxu0 0
        %362 = vmatpush1.bf16.xpose.msra.mxu0 0
        %363 = vmatprep.subr.bf16.mxu0 0
        %364 = vmatpush1.bf16.xpose.msra.mxu0 0
        %365 = vmatprep.subr.bf16.mxu0 0
        %366 = vmatpush1.bf16.xpose.msra.mxu0 0
        %367 = vmatprep.subr.bf16.mxu0 0
        %368 = vmatpush1.bf16.xpose.msra.mxu0 0
        %369 = vmatprep.subr.bf16.mxu0 0
        %370 = vmatpush1.bf16.xpose.msra.mxu0 0
        %371 = vmatprep.subr.bf16.mxu0 0
        %372 = vmatpush1.bf16.xpose.msra.mxu0 0
        %373 = vmatprep.subr.bf16.mxu0 0
        %374 = vmatpush1.bf16.xpose.msra.mxu0 0
        %375 = vmatprep.subr.bf16.mxu0 0
        %376 = vmatpush1.bf16.xpose.msra.mxu0 0
        %377 = vmatprep.subr.bf16.mxu0 0
        %378 = vmatpush1.bf16.xpose.msra.mxu0 0
        %379 = vmatprep.subr.bf16.mxu0 0
        %380 = vmatpush1.bf16.xpose.msra.mxu0 0
        %381 = vmatprep.subr.bf16.mxu0 0
        %382 = vmatpush1.bf16.xpose.msra.mxu0 0
        %383 = vmatprep.subr.bf16.mxu0 0
        %384 = vmatpush1.bf16.xpose.msra.mxu0 0
        %385 = vmatprep.subr.bf16.mxu0 0
        %386 = vmatpush1.bf16.xpose.msra.mxu0 0
        %387 = vmatprep.subr.bf16.mxu0 0
        %388 = vmatpush1.bf16.xpose.msra.mxu0 0
        %389 = vmatprep.mubr.bf16.mxu0 0
        %390 = vmatmul.mubr.bf16.gmra.mrb[0].mxu0 %v352
        %v391 = vpop.f32.mrb[0].mxu0
        %v392 = vadd.f32 0.0, %v391
        %v393 = vpop.f32.mrb[0].mxu0
        %v394 = vpop.f32.mrb[0].mxu0
        %v395 = vpop.f32.mrb[0].mxu0
        %396 = vdwg.mxu0
        %v397 = vsel %vm343, %v392, -inf
        %v398 = vsel %vm350, %v397, -inf
        %399 = vmax.xlane.f32.xlu0 %v398
        %v400 = vpop.xlane.xlu0 %399
        %v401 = vsub.f32 %v397, %v400
        %v402 = vmul.f32 %v401, 1.442695
        %v403 = vpow.pop %v402
        %v404 = vsel %vm350, %v403, 0.0
        %405 = vadd.xlane.f32.xlu0 %v404
        %v406 = vpop.xlane.xlu0 %405
        %v407 = vrcp.pop %v406
        %v408 = vmul.f32 %v403, %v407
        %v409 = vpack.c.bf16 %v408, %v408
        %410 = vrot.lane.b32.xlu0 %v346, 64
        %v411 = vpop.permute.xlu0 %410
        %v413 = vsel %vm350, %v409, 0
        %vm415 = vcmask 1043456
        %v417 = vsel %vm415, %v411, 0
        %419 = vmatprep.subr.bf16.mxu0 0
        %420 = vmatpush1.bf16.msra.mxu0 %v417
        %421 = vmatprep.subr.bf16.mxu0 0
        %422 = vmatpush1.bf16.msra.mxu0 0
        %423 = vmatprep.subr.bf16.mxu0 0
        %424 = vmatpush1.bf16.msra.mxu0 0
        %425 = vmatprep.subr.bf16.mxu0 0
        %426 = vmatpush1.bf16.msra.mxu0 0
        %427 = vmatprep.subr.bf16.mxu0 0
        %428 = vmatpush1.bf16.msra.mxu0 0
        %429 = vmatprep.subr.bf16.mxu0 0
        %430 = vmatpush1.bf16.msra.mxu0 0
        %431 = vmatprep.subr.bf16.mxu0 0
        %432 = vmatpush1.bf16.msra.mxu0 0
        %433 = vmatprep.subr.bf16.mxu0 0
        %434 = vmatpush1.bf16.msra.mxu0 0
        %435 = vmatprep.subr.bf16.mxu0 0
        %436 = vmatpush1.bf16.msra.mxu0 0
        %437 = vmatprep.subr.bf16.mxu0 0
        %438 = vmatpush1.bf16.msra.mxu0 0
        %439 = vmatprep.subr.bf16.mxu0 0
        %440 = vmatpush1.bf16.msra.mxu0 0
        %441 = vmatprep.subr.bf16.mxu0 0
        %442 = vmatpush1.bf16.msra.mxu0 0
        %443 = vmatprep.subr.bf16.mxu0 0
        %444 = vmatpush1.bf16.msra.mxu0 0
        %445 = vmatprep.subr.bf16.mxu0 0
        %446 = vmatpush1.bf16.msra.mxu0 0
        %447 = vmatprep.subr.bf16.mxu0 0
        %448 = vmatpush1.bf16.msra.mxu0 0
        %449 = vmatprep.subr.bf16.mxu0 0
        %450 = vmatpush1.bf16.msra.mxu0 0
        %451 = vmatprep.mubr.bf16.mxu0 0
        %452 = vmatmul.mubr.bf16.gmra.mrb[0].mxu0 %v413
        %v453 = vpop.f32.mrb[0].mxu0
        %v454 = vadd.f32 0.0, %v453
        %v455 = vpop.f32.mrb[0].mxu0
        %v456 = vpop.f32.mrb[0].mxu0
        %v457 = vpop.f32.mrb[0].mxu0
        %458 = vdwg.mxu0
        %460 = vrot.lane.b32.xlu0 %v345, 120
        %v461 = vpop.permute.xlu0 %460
        %462 = vrot.lane.b32.xlu0 %v346, 88
        %v463 = vpop.permute.xlu0 %462
        %v465 = vsel %vm350, %v461, 0
        %v468 = vsel %vm350, %v463, 0
        %470 = vmatprep.subr.bf16.mxu0 0
        %471 = vmatpush1.bf16.xpose.msra.mxu0 %v468
        %472 = vmatprep.subr.bf16.mxu0 0
        %473 = vmatpush1.bf16.xpose.msra.mxu0 0
        %474 = vmatprep.subr.bf16.mxu0 0
        %475 = vmatpush1.bf16.xpose.msra.mxu0 0
        %476 = vmatprep.subr.bf16.mxu0 0
        %477 = vmatpush1.bf16.xpose.msra.mxu0 0
        %478 = vmatprep.subr.bf16.mxu0 0
        %479 = vmatpush1.bf16.xpose.msra.mxu0 0
        %480 = vmatprep.subr.bf16.mxu0 0
        %481 = vmatpush1.bf16.xpose.msra.mxu0 0
        %482 = vmatprep.subr.bf16.mxu0 0
        %483 = vmatpush1.bf16.xpose.msra.mxu0 0
        %484 = vmatprep.subr.bf16.mxu0 0
        %485 = vmatpush1.bf16.xpose.msra.mxu0 0
        %486 = vmatprep.subr.bf16.mxu0 0
        %487 = vmatpush1.bf16.xpose.msra.mxu0 0
        %488 = vmatprep.subr.bf16.mxu0 0
        %489 = vmatpush1.bf16.xpose.msra.mxu0 0
        %490 = vmatprep.subr.bf16.mxu0 0
        %491 = vmatpush1.bf16.xpose.msra.mxu0 0
        %492 = vmatprep.subr.bf16.mxu0 0
        %493 = vmatpush1.bf16.xpose.msra.mxu0 0
        %494 = vmatprep.subr.bf16.mxu0 0
        %495 = vmatpush1.bf16.xpose.msra.mxu0 0
        %496 = vmatprep.subr.bf16.mxu0 0
        %497 = vmatpush1.bf16.xpose.msra.mxu0 0
        %498 = vmatprep.subr.bf16.mxu0 0
        %499 = vmatpush1.bf16.xpose.msra.mxu0 0
        %500 = vmatprep.subr.bf16.mxu0 0
        %501 = vmatpush1.bf16.xpose.msra.mxu0 0
        %502 = vmatprep.mubr.bf16.mxu0 0
        %503 = vmatmul.mubr.bf16.gmra.mrb[0].mxu0 %v465
        %v504 = vpop.f32.mrb[0].mxu0
        %v505 = vadd.f32 0.0, %v504
        %v506 = vpop.f32.mrb[0].mxu0
        %v507 = vpop.f32.mrb[0].mxu0
        %v508 = vpop.f32.mrb[0].mxu0
        %509 = vdwg.mxu0
        %v510 = vsel %vm343, %v505, -inf
        %v511 = vsel %vm350, %v510, -inf
        %512 = vmax.xlane.f32.xlu0 %v511
        %v513 = vpop.xlane.xlu0 %512
        %v514 = vsub.f32 %v510, %v513
        %v515 = vmul.f32 %v514, 1.442695
        %v516 = vpow.pop %v515
        %v517 = vsel %vm350, %v516, 0.0
        %518 = vadd.xlane.f32.xlu0 %v517
        %v519 = vpop.xlane.xlu0 %518
        %v520 = vrcp.pop %v519
        %v521 = vmul.f32 %v516, %v520
        %v522 = vpack.c.bf16 %v521, %v521
        %523 = vrot.lane.b32.xlu0 %v346, 56
        %v524 = vpop.permute.xlu0 %523
        %v526 = vsel %vm350, %v522, 0
        %v529 = vsel %vm415, %v524, 0
        %531 = vmatprep.subr.bf16.mxu0 0
        %532 = vmatpush1.bf16.msra.mxu0 %v529
        %533 = vmatprep.subr.bf16.mxu0 0
        %534 = vmatpush1.bf16.msra.mxu0 0
        %535 = vmatprep.subr.bf16.mxu0 0
        %536 = vmatpush1.bf16.msra.mxu0 0
        %537 = vmatprep.subr.bf16.mxu0 0
        %538 = vmatpush1.bf16.msra.mxu0 0
        %539 = vmatprep.subr.bf16.mxu0 0
        %540 = vmatpush1.bf16.msra.mxu0 0
        %541 = vmatprep.subr.bf16.mxu0 0
        %542 = vmatpush1.bf16.msra.mxu0 0
        %543 = vmatprep.subr.bf16.mxu0 0
        %544 = vmatpush1.bf16.msra.mxu0 0
        %545 = vmatprep.subr.bf16.mxu0 0
        %546 = vmatpush1.bf16.msra.mxu0 0
        %547 = vmatprep.subr.bf16.mxu0 0
        %548 = vmatpush1.bf16.msra.mxu0 0
        %549 = vmatprep.subr.bf16.mxu0 0
        %550 = vmatpush1.bf16.msra.mxu0 0
        %551 = vmatprep.subr.bf16.mxu0 0
        %552 = vmatpush1.bf16.msra.mxu0 0
        %553 = vmatprep.subr.bf16.mxu0 0
        %554 = vmatpush1.bf16.msra.mxu0 0
        %555 = vmatprep.subr.bf16.mxu0 0
        %556 = vmatpush1.bf16.msra.mxu0 0
        %557 = vmatprep.subr.bf16.mxu0 0
        %558 = vmatpush1.bf16.msra.mxu0 0
        %559 = vmatprep.subr.bf16.mxu0 0
        %560 = vmatpush1.bf16.msra.mxu0 0
        %561 = vmatprep.subr.bf16.mxu0 0
        %562 = vmatpush1.bf16.msra.mxu0 0
        %563 = vmatprep.mubr.bf16.mxu0 0
        %564 = vmatmul.mubr.bf16.gmra.mrb[0].mxu0 %v526
        %v565 = vpop.f32.mrb[0].mxu0
        %v566 = vadd.f32 0.0, %v565
        %v567 = vpop.f32.mrb[0].mxu0
        %v568 = vpop.f32.mrb[0].mxu0
        %v569 = vpop.f32.mrb[0].mxu0
        %570 = vdwg.mxu0
        %571 = vrot.lane.b32.xlu0 %v345, 112
        %v572 = vpop.permute.xlu0 %571
        %573 = vrot.lane.b32.xlu0 %v346, 80
        %v574 = vpop.permute.xlu0 %573
        %v576 = vsel %vm350, %v572, 0
        %v579 = vsel %vm350, %v574, 0
        %581 = vmatprep.subr.bf16.mxu0 0
        %582 = vmatpush1.bf16.xpose.msra.mxu0 %v579
        %583 = vmatprep.subr.bf16.mxu0 0
        %584 = vmatpush1.bf16.xpose.msra.mxu0 0
        %585 = vmatprep.subr.bf16.mxu0 0
        %586 = vmatpush1.bf16.xpose.msra.mxu0 0
        %587 = vmatprep.subr.bf16.mxu0 0
        %588 = vmatpush1.bf16.xpose.msra.mxu0 0
        %589 = vmatprep.subr.bf16.mxu0 0
        %590 = vmatpush1.bf16.xpose.msra.mxu0 0
        %591 = vmatprep.subr.bf16.mxu0 0
        %592 = vmatpush1.bf16.xpose.msra.mxu0 0
        %593 = vmatprep.subr.bf16.mxu0 0
        %594 = vmatpush1.bf16.xpose.msra.mxu0 0
        %595 = vmatprep.subr.bf16.mxu0 0
        %596 = vmatpush1.bf16.xpose.msra.mxu0 0
        %597 = vmatprep.subr.bf16.mxu0 0
        %598 = vmatpush1.bf16.xpose.msra.mxu0 0
        %599 = vmatprep.subr.bf16.mxu0 0
        %600 = vmatpush1.bf16.xpose.msra.mxu0 0
        %601 = vmatprep.subr.bf16.mxu0 0
        %602 = vmatpush1.bf16.xpose.msra.mxu0 0
        %603 = vmatprep.subr.bf16.mxu0 0
        %604 = vmatpush1.bf16.xpose.msra.mxu0 0
        %605 = vmatprep.subr.bf16.mxu0 0
        %606 = vmatpush1.bf16.xpose.msra.mxu0 0
        %607 = vmatprep.subr.bf16.mxu0 0
        %608 = vmatpush1.bf16.xpose.msra.mxu0 0
        %609 = vmatprep.subr.bf16.mxu0 0
        %610 = vmatpush1.bf16.xpose.msra.mxu0 0
        %611 = vmatprep.subr.bf16.mxu0 0
        %612 = vmatpush1.bf16.xpose.msra.mxu0 0
        %613 = vmatprep.mubr.bf16.mxu0 0
        %614 = vmatmul.mubr.bf16.gmra.mrb[0].mxu0 %v576
        %v615 = vpop.f32.mrb[0].mxu0
        %v616 = vadd.f32 0.0, %v615
        %v617 = vpop.f32.mrb[0].mxu0
        %v618 = vpop.f32.mrb[0].mxu0
        %v619 = vpop.f32.mrb[0].mxu0
        %620 = vdwg.mxu0
        %v621 = vsel %vm343, %v616, -inf
        %v622 = vsel %vm350, %v621, -inf
        %623 = vmax.xlane.f32.xlu0 %v622
        %v624 = vpop.xlane.xlu0 %623
        %v625 = vsub.f32 %v621, %v624
        %v626 = vmul.f32 %v625, 1.442695
        %v627 = vpow.pop %v626
        %v628 = vsel %vm350, %v627, 0.0
        %629 = vadd.xlane.f32.xlu0 %v628
        %v630 = vpop.xlane.xlu0 %629
        %v631 = vrcp.pop %v630
        %v632 = vmul.f32 %v627, %v631
        %v633 = vpack.c.bf16 %v632, %v632
        %634 = vrot.lane.b32.xlu0 %v346, 48
        %v635 = vpop.permute.xlu0 %634
        %v637 = vsel %vm350, %v633, 0
        %v640 = vsel %vm415, %v635, 0
        %642 = vmatprep.subr.bf16.mxu0 0
        %643 = vmatpush1.bf16.msra.mxu0 %v640
        %644 = vmatprep.subr.bf16.mxu0 0
        %645 = vmatpush1.bf16.msra.mxu0 0
        %646 = vmatprep.subr.bf16.mxu0 0
        %647 = vmatpush1.bf16.msra.mxu0 0
        %648 = vmatprep.subr.bf16.mxu0 0
        %649 = vmatpush1.bf16.msra.mxu0 0
        %650 = vmatprep.subr.bf16.mxu0 0
        %651 = vmatpush1.bf16.msra.mxu0 0
        %652 = vmatprep.subr.bf16.mxu0 0
        %653 = vmatpush1.bf16.msra.mxu0 0
        %654 = vmatprep.subr.bf16.mxu0 0
        %655 = vmatpush1.bf16.msra.mxu0 0
        %656 = vmatprep.subr.bf16.mxu0 0
        %657 = vmatpush1.bf16.msra.mxu0 0
        %658 = vmatprep.subr.bf16.mxu0 0
        %659 = vmatpush1.bf16.msra.mxu0 0
        %660 = vmatprep.subr.bf16.mxu0 0
        %661 = vmatpush1.bf16.msra.mxu0 0
        %662 = vmatprep.subr.bf16.mxu0 0
        %663 = vmatpush1.bf16.msra.mxu0 0
        %664 = vmatprep.subr.bf16.mxu0 0
        %665 = vmatpush1.bf16.msra.mxu0 0
        %666 = vmatprep.subr.bf16.mxu0 0
        %667 = vmatpush1.bf16.msra.mxu0 0
        %668 = vmatprep.subr.bf16.mxu0 0
        %669 = vmatpush1.bf16.msra.mxu0 0
        %670 = vmatprep.subr.bf16.mxu0 0
        %671 = vmatpush1.bf16.msra.mxu0 0
        %672 = vmatprep.subr.bf16.mxu0 0
        %673 = vmatpush1.bf16.msra.mxu0 0
        %674 = vmatprep.mubr.bf16.mxu0 0
        %675 = vmatmul.mubr.bf16.gmra.mrb[0].mxu0 %v637
        %v676 = vpop.f32.mrb[0].mxu0
        %v677 = vadd.f32 0.0, %v676
        %v678 = vpop.f32.mrb[0].mxu0
        %v679 = vpop.f32.mrb[0].mxu0
        %v680 = vpop.f32.mrb[0].mxu0
        %681 = vdwg.mxu0
        %682 = vrot.lane.b32.xlu0 %v345, 104
        %v683 = vpop.permute.xlu0 %682
        %684 = vrot.lane.b32.xlu0 %v346, 72
        %v685 = vpop.permute.xlu0 %684
        %v687 = vsel %vm350, %v683, 0
        %v690 = vsel %vm350, %v685, 0
        %692 = vmatprep.subr.bf16.mxu0 0
        %693 = vmatpush1.bf16.xpose.msra.mxu0 %v690
        %694 = vmatprep.subr.bf16.mxu0 0
        %695 = vmatpush1.bf16.xpose.msra.mxu0 0
        %696 = vmatprep.subr.bf16.mxu0 0
        %697 = vmatpush1.bf16.xpose.msra.mxu0 0
        %698 = vmatprep.subr.bf16.mxu0 0
        %699 = vmatpush1.bf16.xpose.msra.mxu0 0
        %700 = vmatprep.subr.bf16.mxu0 0
        %701 = vmatpush1.bf16.xpose.msra.mxu0 0
        %702 = vmatprep.subr.bf16.mxu0 0
        %703 = vmatpush1.bf16.xpose.msra.mxu0 0
        %704 = vmatprep.subr.bf16.mxu0 0
        %705 = vmatpush1.bf16.xpose.msra.mxu0 0
        %706 = vmatprep.subr.bf16.mxu0 0
        %707 = vmatpush1.bf16.xpose.msra.mxu0 0
        %708 = vmatprep.subr.bf16.mxu0 0
        %709 = vmatpush1.bf16.xpose.msra.mxu0 0
        %710 = vmatprep.subr.bf16.mxu0 0
        %711 = vmatpush1.bf16.xpose.msra.mxu0 0
        %712 = vmatprep.subr.bf16.mxu0 0
        %713 = vmatpush1.bf16.xpose.msra.mxu0 0
        %714 = vmatprep.subr.bf16.mxu0 0
        %715 = vmatpush1.bf16.xpose.msra.mxu0 0
        %716 = vmatprep.subr.bf16.mxu0 0
        %717 = vmatpush1.bf16.xpose.msra.mxu0 0
        %718 = vmatprep.subr.bf16.mxu0 0
        %719 = vmatpush1.bf16.xpose.msra.mxu0 0
        %720 = vmatprep.subr.bf16.mxu0 0
        %721 = vmatpush1.bf16.xpose.msra.mxu0 0
        %722 = vmatprep.subr.bf16.mxu0 0
        %723 = vmatpush1.bf16.xpose.msra.mxu0 0
        %724 = vmatprep.mubr.bf16.mxu0 0
        %725 = vmatmul.mubr.bf16.gmra.mrb[0].mxu0 %v687
        %v726 = vpop.f32.mrb[0].mxu0
        %v727 = vadd.f32 0.0, %v726
        %v728 = vpop.f32.mrb[0].mxu0
        %v729 = vpop.f32.mrb[0].mxu0
        %v730 = vpop.f32.mrb[0].mxu0
        %731 = vdwg.mxu0
        %v732 = vsel %vm343, %v727, -inf
        %v733 = vsel %vm350, %v732, -inf
        %734 = vmax.xlane.f32.xlu0 %v733
        %v735 = vpop.xlane.xlu0 %734
        %v736 = vsub.f32 %v732, %v735
        %v737 = vmul.f32 %v736, 1.442695
        %v738 = vpow.pop %v737
        %v739 = vsel %vm350, %v738, 0.0
        %740 = vadd.xlane.f32.xlu0 %v739
        %v741 = vpop.xlane.xlu0 %740
        %v742 = vrcp.pop %v741
        %v743 = vmul.f32 %v738, %v742
        %v744 = vpack.c.bf16 %v743, %v743
        %745 = vrot.lane.b32.xlu0 %v346, 40
        %v746 = vpop.permute.xlu0 %745
        %v748 = vsel %vm350, %v744, 0
        %v751 = vsel %vm415, %v746, 0
        %753 = vmatprep.subr.bf16.mxu0 0
        %754 = vmatpush1.bf16.msra.mxu0 %v751
        %755 = vmatprep.subr.bf16.mxu0 0
        %756 = vmatpush1.bf16.msra.mxu0 0
        %757 = vmatprep.subr.bf16.mxu0 0
        %758 = vmatpush1.bf16.msra.mxu0 0
        %759 = vmatprep.subr.bf16.mxu0 0
        %760 = vmatpush1.bf16.msra.mxu0 0
        %761 = vmatprep.subr.bf16.mxu0 0
        %762 = vmatpush1.bf16.msra.mxu0 0
        %763 = vmatprep.subr.bf16.mxu0 0
        %764 = vmatpush1.bf16.msra.mxu0 0
        %765 = vmatprep.subr.bf16.mxu0 0
        %766 = vmatpush1.bf16.msra.mxu0 0
        %767 = vmatprep.subr.bf16.mxu0 0
        %768 = vmatpush1.bf16.msra.mxu0 0
        %769 = vmatprep.subr.bf16.mxu0 0
        %770 = vmatpush1.bf16.msra.mxu0 0
        %771 = vmatprep.subr.bf16.mxu0 0
        %772 = vmatpush1.bf16.msra.mxu0 0
        %773 = vmatprep.subr.bf16.mxu0 0
        %774 = vmatpush1.bf16.msra.mxu0 0
        %775 = vmatprep.subr.bf16.mxu0 0
        %776 = vmatpush1.bf16.msra.mxu0 0
        %777 = vmatprep.subr.bf16.mxu0 0
        %778 = vmatpush1.bf16.msra.mxu0 0
        %779 = vmatprep.subr.bf16.mxu0 0
        %780 = vmatpush1.bf16.msra.mxu0 0
        %781 = vmatprep.subr.bf16.mxu0 0
        %782 = vmatpush1.bf16.msra.mxu0 0
        %783 = vmatprep.subr.bf16.mxu0 0
        %784 = vmatpush1.bf16.msra.mxu0 0
        %785 = vmatprep.mubr.bf16.mxu0 0
        %786 = vmatmul.mubr.bf16.gmra.mrb[0].mxu0 %v748
        %v787 = vpop.f32.mrb[0].mxu0
        %v788 = vadd.f32 0.0, %v787
        %v789 = vpop.f32.mrb[0].mxu0
        %v790 = vpop.f32.mrb[0].mxu0
        %v791 = vpop.f32.mrb[0].mxu0
        %792 = vdwg.mxu0
        %794 = vrot.lane.b32.xlu0 %v566, 8
        %v795 = vpop.permute.xlu0 %794
        %798 = vrot.lane.b32.xlu0 %v677, 16
        %v799 = vpop.permute.xlu0 %798
        %802 = vrot.lane.b32.xlu0 %v788, 24
        %v803 = vpop.permute.xlu0 %802
        %v805 = vsel %vm350, %v454, %v795
        %vm806 = vcmask 130048
        %v807 = vsel %vm806, %v805, %v799
        %vm808 = vcmask 195584
        %v809 = vsel %vm808, %v807, %v803
        %v810 = vpack.c.bf16 %v809, %v809
        %v811 = vld [vmem:[#allocation7] sm:$0xf]
        %v812 = vld [vmem:[#allocation7 + $0x4] sm:$0xf]
        %v813 = vld [vmem:[#allocation7 + $0x8] sm:$0xf]
        %v814 = vld [vmem:[#allocation7 + $0xc] sm:$0xf]
        %v815 = vld [vmem:[%s4] sm:$0x1]
        %v817 = vlaneseq
        %v818 = vshrl.u32 %v817, 7
        %v819 = vsub.s32 0, %v818
        %v820 = vrot.slane %v815, %v819
        %v826 = vunpack.c.l.b16 %v811
        %v827 = vunpack.c.l.b16 %v812
        %v828 = vunpack.c.l.b16 %v813
        %v829 = vunpack.c.l.b16 %v814
        %v830 = vpack.c.b16 %v827, %v826
        %v831 = vpack.c.b16 %v829, %v828
        %v835 = vsel %vm295, %v810, 0
        %837 = vmatprep.subr.bf16.mxu0 0
        %838 = vmatpush1.bf16.msra.mxu0 %v830
        %839 = vmatprep.subr.bf16.mxu0 0
        %840 = vmatpush1.bf16.msra.mxu0 %v831
        %841 = vmatprep.subr.bf16.mxu0 0
        %842 = vmatpush1.bf16.msra.mxu0 0
        %843 = vmatprep.subr.bf16.mxu0 0
        %844 = vmatpush1.bf16.msra.mxu0 0
        %845 = vmatprep.subr.bf16.mxu0 0
        %846 = vmatpush1.bf16.msra.mxu0 0
        %847 = vmatprep.subr.bf16.mxu0 0
        %848 = vmatpush1.bf16.msra.mxu0 0
        %849 = vmatprep.subr.bf16.mxu0 0
        %850 = vmatpush1.bf16.msra.mxu0 0
        %851 = vmatprep.subr.bf16.mxu0 0
        %852 = vmatpush1.bf16.msra.mxu0 0
        %853 = vmatprep.subr.bf16.mxu0 0
        %854 = vmatpush1.bf16.msra.mxu0 0
        %855 = vmatprep.subr.bf16.mxu0 0
        %856 = vmatpush1.bf16.msra.mxu0 0
        %857 = vmatprep.subr.bf16.mxu0 0
        %858 = vmatpush1.bf16.msra.mxu0 0
        %859 = vmatprep.subr.bf16.mxu0 0
        %860 = vmatpush1.bf16.msra.mxu0 0
        %861 = vmatprep.subr.bf16.mxu0 0
        %862 = vmatpush1.bf16.msra.mxu0 0
        %863 = vmatprep.subr.bf16.mxu0 0
        %864 = vmatpush1.bf16.msra.mxu0 0
        %865 = vmatprep.subr.bf16.mxu0 0
        %866 = vmatpush1.bf16.msra.mxu0 0
        %867 = vmatprep.subr.bf16.mxu0 0
        %868 = vmatpush1.bf16.msra.mxu0 0
        %869 = vmatprep.mubr.bf16.mxu0 0
        %870 = vmatmul.mubr.bf16.gmra.mrb[0].mxu0 %v835
        %v871 = vpop.f32.mrb[0].mxu0
        %v872 = vadd.f32 %v820, %v871
        %v873 = vpop.f32.mrb[0].mxu0
        %v874 = vpop.f32.mrb[0].mxu0
        %v875 = vpop.f32.mrb[0].mxu0
        %876 = vdwg.mxu0
        %877 = vst.msk [vmem:[%s268] sm:$0xff] %vm295, %v872
        %s878 = sand.u32 %s141, 1
        %s879 = scalar_lea.sflag [#allocation4], %s878
        %s880 = sand.u32 %s141, 1
        %s881 = smul.addr %s880, 8
        %s882 = scalar_lea.vmem [#allocation8], %s881
        // Predicated region
        $region53: #{tpu_custom_call.1} parent=39 // pred_check
          %p883 = pneg %p151
        $region54: #{tpu_custom_call.1} parent=39 // pred_check_branch
          %885 = sbr.rel (%p883) target = $region56
        $region55: #{tpu_custom_call.1} parent=39 // pred_region
          %s887 = ssub.s32 128, 128
          %888 = vsyncadd %s879, %s887
          %s889 = smul.addr %s23, 128
          %s890 = scalar_lea.hbm %s5, %s889
          %s892 = sshll.u32 %s882, 4
          %s893 = int_to_ptr.vmem [resolvable:$true] %s892
          %895 = dma.vmem_to_hbm [thread:$0]  %s893, 128, %s890, %s879
        $region56: #{tpu_custom_call.1} parent=39 // pred_fallthru
          _
      $region40: #{tpu_custom_call.1} parent=5 // pred_fallthru
        _
      %p896 = scmp.le.s32.totalorder 2, %s18
      // Predicated region
      $region57: #{tpu_custom_call.1} parent=5 // pred_check
        %p897 = pneg %p896
      $region58: #{tpu_custom_call.1} parent=5 // pred_check_branch
        %899 = sbr.rel (%p897) target = $region60
      $region59: #{tpu_custom_call.1} parent=5 // pred_region
        %s900 = ssub.s32 %s18, 2
        // Predicated region
        $region61: #{tpu_custom_call.1} parent=59 // pred_check
          %p901 = pneg %p157
        $region62: #{tpu_custom_call.1} parent=59 // pred_check_branch
          %903 = sbr.rel (%p901) target = $region64
        $region63: #{tpu_custom_call.1} parent=59 // pred_region
          %s904 = sand.u32 %s142, 1
          %s905 = scalar_lea.sflag [#allocation4], %s904
          %s906 = sand.u32 %s142, 1
          %s907 = smul.addr %s906, 8
          %s908 = scalar_lea.vmem [#allocation8], %s907
          %909 = dma.done %s905, 128
        $region64: #{tpu_custom_call.1} parent=59 // pred_fallthru
          _
      $region60: #{tpu_custom_call.1} parent=5 // pred_fallthru
        _
    $region6: #{tpu_custom_call.1} parent=1 // loop_footer
      %s22 = sadd.s32 1, %s18
    $region7: #{tpu_custom_call.1} parent=1 // loop_footer_branch
      %17 = sbr.rel target = $region3
    $region8: #{tpu_custom_call.1} parent=1 // loop_exit
      _
    %910 = vsyncpa [#allocation3], 1
    %s911 = scalar_lea.sflag [#allocation3], 1
    %912 = vsyncpa %s911, 1
    %913 = vsyncpa [#allocation6], 1
    %914 = vsyncpa [#allocation4], 1
    %s915 = scalar_lea.sflag [#allocation4], 1
    %916 = vsyncpa %s915, 1

</llo_original>
